<compile_context>
chip_gen: v7x
topology: tpu7x:2x2x1
jax: 0.10.0
libtpu: 0.0.40
codegen_flags: <defaults>
</compile_context>

<pallas_src>
import math
from functools import partial

import jax
import jax.numpy as jnp
from jax.experimental import pallas as pl
from jax.experimental.pallas import tpu as pltpu


def _round_up(v, m):
    return ((v + m - 1) // m) * m


def _vmem_cap_bytes():
    """Physical VMEM capacity (generation-aware), with a safe fallback."""
    try:
        info = pltpu.get_tpu_info()
        cap = getattr(info, "vmem_capacity_bytes", None)
        if cap:
            return int(cap)
    except Exception:
        pass
    return 64 * 1024 * 1024   # conservative (v7x-sized) fallback


# --------------------------- projection kernel ---------------------------
# x_ = x @ Q + bias  (row-tiled), also emits the bf16 hi/lo split of x_
# consumed by the edge kernel's gather matmul.

def _project_kernel(x_ref, q_ref, b_ref, xo_ref, hi_ref, lo_ref):
    xo = jnp.dot(x_ref[...], q_ref[...],
                 preferred_element_type=jnp.float32) + b_ref[...]
    xo_ref[...] = xo
    hi = xo.astype(jnp.bfloat16)
    hi_ref[...] = hi
    lo_ref[...] = (xo - hi.astype(jnp.float32)).astype(jnp.bfloat16)


def _project(xp, Qp, bp, *, row_tile):
    Np, Fp = xp.shape
    Dp = Qp.shape[1]
    n_rows = Np // row_tile

    est = 4 * (2 * (row_tile * Fp + 3 * row_tile * Dp) + Fp * Dp + Dp)
    vmem_limit = int(min(max(2 * est, 16 << 20), int(0.85 * _vmem_cap_bytes())))

    out_shapes = (jax.ShapeDtypeStruct((Np, Dp), jnp.float32),
                  jax.ShapeDtypeStruct((Np, Dp), jnp.bfloat16),
                  jax.ShapeDtypeStruct((Np, Dp), jnp.bfloat16))

    return pl.pallas_call(
        _project_kernel,
        out_shape=out_shapes,
        grid_spec=pltpu.PrefetchScalarGridSpec(
            num_scalar_prefetch=0,
            grid=(n_rows,),
            in_specs=[
                pl.BlockSpec((row_tile, Fp), lambda i: (i, 0)),   # x rows
                pl.BlockSpec((Fp, Dp), lambda i: (0, 0)),          # Q (resident)
                pl.BlockSpec((1, Dp), lambda i: (0, 0)),           # bias
            ],
            out_specs=(
                pl.BlockSpec((row_tile, Dp), lambda i: (i, 0)),
                pl.BlockSpec((row_tile, Dp), lambda i: (i, 0)),
                pl.BlockSpec((row_tile, Dp), lambda i: (i, 0)),
            ),
        ),
        compiler_params=pltpu.CompilerParams(
            dimension_semantics=("parallel",),
            vmem_limit_bytes=vmem_limit,
        ),
        cost_estimate=pl.CostEstimate(
            flops=2 * Np * Fp * Dp,
            transcendentals=0,
            bytes_accessed=4 * (Np * Fp + Fp * Dp + Dp + 2 * Np * Dp)),
    )(xp, Qp, bp)


# ----------------------------- edge kernel -------------------------------
# grid = (node_row_tiles [parallel], edge_tiles [arbitrary/reduction])
# S row tile accumulates directly in the resident output ref; masked row
# softmax at the last edge step.

def _edge_kernel(x_hi_ref, x_lo_ref, a_ref,
                 src_c_ref, dst_c_ref, src_r_ref,
                 s_ref, *, num_nodes, node_tile):
    i = pl.program_id(0)                 # node-row tile of S
    t = pl.program_id(1)                 # edge tile (reduction axis)
    nt = pl.num_programs(1)

    tn, n_pad = s_ref.shape
    te = src_c_ref.shape[0]

    @pl.when(t == 0)
    def _init():
        s_ref[...] = jnp.zeros_like(s_ref)

    src = src_c_ref[...]                 # [TE,1] i32  (-1 => padded edge)
    dst = dst_c_ref[...]                 # [TE,1]
    src_row = src_r_ref[...]             # [1,TE]

    col_ids = jax.lax.broadcasted_iota(jnp.int32, (te, n_pad), 1)
    src_oh = col_ids == src              # [TE,Np] one-hot(src), bool
    dst_oh = col_ids == dst              # [TE,Np] one-hot(dst), bool

    # Fused gather: x_[src] - x_[dst] = (onehot(src) - onehot(dst)) @ x_
    # The one-hot difference is exactly {-1,0,1} in bf16; x_ uses a hi/lo
    # bf16 split, so two native bf16 MXU passes reproduce the f32 result.
    d = (src_oh.astype(jnp.float32)
         - dst_oh.astype(jnp.float32)).astype(jnp.bfloat16)          # [TE,Np]
    diff = jnp.abs(
        jnp.dot(d, x_hi_ref[...], preferred_element_type=jnp.float32)
        + jnp.dot(d, x_lo_ref[...], preferred_element_type=jnp.float32))  # [TE,Dp]

    # a-projection as VPU multiply + lane reduction (MXU slot stays free).
    vals = jax.nn.sigmoid(
        jnp.sum(diff * a_ref[...], axis=-1, keepdims=True))          # [TE,1] f32

    # Scatter: S[rows] += onehot(src)^T @ (onehot(dst) * vals), as two bf16
    # MXU passes via a hi/lo split of the real-valued operand.
    w = dst_oh.astype(jnp.float32) * vals                            # [TE,Np]
    w_hi = w.astype(jnp.bfloat16)
    w_lo = (w - w_hi.astype(jnp.float32)).astype(jnp.bfloat16)

    node_ids = jax.lax.broadcasted_iota(jnp.int32, (tn, te), 0) + i * node_tile
    u_t = (node_ids == src_row).astype(jnp.bfloat16)                 # [TN,TE]

    s_ref[...] += (jnp.dot(u_t, w_hi, preferred_element_type=jnp.float32)
                   + jnp.dot(u_t, w_lo, preferred_element_type=jnp.float32))

    # Last edge tile: zeros-included row softmax over the *real* N columns.
    @pl.when(t == nt - 1)
    def _finish():
        s = s_ref[...]
        lane = jax.lax.broadcasted_iota(jnp.int32, s.shape, 1)
        s = jnp.where(lane < num_nodes, s, -jnp.inf)
        m = jnp.max(s, axis=1, keepdims=True)
        e = jnp.exp(s - m)
        denom = jnp.sum(e, axis=1, keepdims=True)
        s_ref[...] = e * pl.reciprocal(denom, approx=False)


# ------------------------------- wrapper ---------------------------------

def sparse_graph_learn(x, edge_index, Q, bias, a, *,
                       edge_tile=512, node_tile=256):
    N, F = x.shape
    D = Q.shape[1]
    E = edge_index.shape[1]

    TN = _round_up(node_tile, 128)       # S row tile (multiple of 128)
    TE = _round_up(edge_tile, 128)       # edge tile / MXU K dim
    Np = _round_up(N, TN)                # padded node count (multiple of TN)
    Fp = _round_up(F, 128)
    Dp = _round_up(D, 128)
    Ep = _round_up(max(E, 1), TE)
    n_row_tiles = Np // TN
    n_edge_tiles = Ep // TE

    xp = jnp.zeros((Np, Fp), jnp.float32).at[:N, :F].set(x.astype(jnp.float32))
    Qp = jnp.zeros((Fp, Dp), jnp.float32).at[:F, :D].set(Q.astype(jnp.float32))
    bp = jnp.zeros((1, Dp), jnp.float32).at[0, :D].set(
        bias.reshape(-1).astype(jnp.float32))
    ap = jnp.zeros((1, Dp), jnp.float32).at[0, :D].set(
        a.reshape(-1).astype(jnp.float32))

    # Hoisted projection: x_ (f32) + its bf16 hi/lo split for the edge kernel.
    x_out_p, x_hi, x_lo = _project(xp, Qp, bp, row_tile=TN)

    src = edge_index[0].astype(jnp.int32)
    dst = edge_index[1].astype(jnp.int32)
    pad = jnp.full((Ep - E,), -1, dtype=jnp.int32)    # -1 => dead (padded) edge
    src_p = jnp.concatenate([src, pad])
    dst_p = jnp.concatenate([dst, pad])
    src_col = src_p.reshape(Ep, 1)
    dst_col = dst_p.reshape(Ep, 1)
    src_row = src_p.reshape(1, Ep)                    # row layout for U^T build

    # Generous per-step working-set estimate (resident blocks + live temps).
    est = (2 * 2 * Np * Dp * 2            # x_hi/x_lo (double-buffered, bf16)
           + 2 * Dp * 4                   # a row
           + 2 * 3 * TE * 4               # edge index tiles (double-buffered)
           + 2 * TN * Np * 4              # resident S row tile
           + 8 * TE * Np * 4              # one-hot / mask / w temporaries
           + 2 * TN * Np * 4              # matmul partials before the +=
           + TN * TE * 2                  # u_t
           + 3 * TE * Dp * 4)             # diff temporaries
    vmem_limit = int(min(max(int(1.5 * est), 32 << 20),
                         int(0.85 * _vmem_cap_bytes())))

    flops = n_row_tiles * n_edge_tiles * (4 * TE * Np * Dp + 4 * TN * TE * Np)
    transcendentals = n_row_tiles * Ep + Np * Np
    bytes_accessed = 2 * 2 * Np * Dp + 4 * Dp + n_row_tiles * 4 * 3 * Ep + 4 * Np * Np

    S_p = pl.pallas_call(
        partial(_edge_kernel, num_nodes=N, node_tile=TN),
        out_shape=jax.ShapeDtypeStruct((Np, Np), jnp.float32),
        grid_spec=pltpu.PrefetchScalarGridSpec(
            num_scalar_prefetch=0,
            grid=(n_row_tiles, n_edge_tiles),
            in_specs=[
                pl.BlockSpec((Np, Dp), lambda i, t: (0, 0)),   # x_ hi (resident)
                pl.BlockSpec((Np, Dp), lambda i, t: (0, 0)),   # x_ lo (resident)
                pl.BlockSpec((1, Dp), lambda i, t: (0, 0)),    # a row (resident)
                pl.BlockSpec((TE, 1), lambda i, t: (t, 0)),    # src col (pipelined)
                pl.BlockSpec((TE, 1), lambda i, t: (t, 0)),    # dst col (pipelined)
                pl.BlockSpec((1, TE), lambda i, t: (0, t)),    # src row (pipelined)
            ],
            out_specs=pl.BlockSpec((TN, Np), lambda i, t: (i, 0)),  # S row tile
        ),
        compiler_params=pltpu.CompilerParams(
            dimension_semantics=("parallel", "arbitrary"),
            vmem_limit_bytes=vmem_limit,
        ),
        cost_estimate=pl.CostEstimate(
            flops=flops,
            transcendentals=transcendentals,
            bytes_accessed=bytes_accessed,
        ),
    )(x_hi, x_lo, ap, src_col, dst_col, src_row)

    return x_out_p[:N, :D], S_p[:N, :N]


def ref_forward(x, edge_index, Q, bias, a):
    """Pure-JAX reference mirroring the PyTorch module."""
    x_ = x @ Q + bias
    s = jnp.abs(x_[edge_index[0]] - x_[edge_index[1]])
    vals = jax.nn.sigmoid(s @ a.reshape(-1, 1)).reshape(-1)
    N = x.shape[0]
    S = jnp.zeros((N, N), jnp.float32).at[edge_index[0], edge_index[1]].add(vals)
    S = jax.nn.softmax(S, axis=1)
    return x_, S


if __name__ == "__main__":
    # Small synthetic problem: N nodes, F input features, D output features, E edges.
    N, F, D, E = 16, 16, 32, 32

    key = jax.random.PRNGKey(0)
    kx, ke0, ke1, kq, ka, kb = jax.random.split(key, 6)

    x = jax.random.normal(kx, (N, F), dtype=jnp.float32)
    edge_index = jnp.stack([
        jax.random.randint(ke0, (E,), 0, N, dtype=jnp.int32),
        jax.random.randint(ke1, (E,), 0, N, dtype=jnp.int32),
    ], axis=0)                                                    # [2, E]

    # Deterministic parameter init mimicking the PyTorch reset_parameters().
    fan_in_Q = D
    bound_q = math.sqrt(6.0 / (11.0 * fan_in_Q))
    Q = jax.random.uniform(kq, (F, D), minval=-bound_q, maxval=bound_q,
                           dtype=jnp.float32)
    fan_in_a = 1
    bound_a = math.sqrt(6.0 / (11.0 * fan_in_a))
    a = jax.random.uniform(ka, (D, 1), minval=-bound_a, maxval=bound_a,
                           dtype=jnp.float32)
    bound_b = 1.0 / math.sqrt(fan_in_Q)
    bias = jax.random.uniform(kb, (D,), minval=-bound_b, maxval=bound_b,
                              dtype=jnp.float32)

    x_out, S = sparse_graph_learn(x, edge_index, Q, bias, a)
    jax.block_until_ready((x_out, S))

    x_ref, S_ref = ref_forward(x, edge_index, Q, bias, a)
    assert x_out.shape == (N, D) and S.shape == (N, N)
    assert jnp.allclose(x_out, x_ref, atol=1e-5, rtol=1e-5), "x_ mismatch"
    # S path uses bf16 hi/lo MXU matmuls (~2^-18 relative), so a slightly
    # looser tolerance than pure-f32 is appropriate.
    assert jnp.allclose(S, S_ref, atol=1e-4, rtol=1e-4), "S mismatch"

    print("KERNEL_OK")
</pallas_src>

<mosaic_0001>
module attributes {stable_mosaic.version = 11 : i64} {
  func.func @_project_kernel(%arg0: i32, %arg1: memref<256x128xf32, #tpu.memory_space<vmem>>, %arg2: memref<128x128xf32, #tpu.memory_space<vmem>>, %arg3: memref<1x128xf32, #tpu.memory_space<vmem>>, %arg4: memref<256x128xf32, #tpu.memory_space<vmem>>, %arg5: memref<256x128xbf16, #tpu.memory_space<vmem>>, %arg6: memref<256x128xbf16, #tpu.memory_space<vmem>>) attributes {dimension_semantics = [#tpu.dimension_semantics<parallel>], iteration_bounds = array<i64: 1>, scalar_prefetch = 0 : i64, scratch_operands = 0 : i64, tpu.core_type = #tpu.core_type<tc>, window_params = [{transform_indices = @transform_0, window_bounds = array<i64: 256, 128>}, {pipeline_mode = #tpu.pipeline_mode<synchronous>, transform_indices = @transform_1, window_bounds = array<i64: 128, 128>}, {pipeline_mode = #tpu.pipeline_mode<synchronous>, transform_indices = @transform_2, window_bounds = array<i64: 1, 128>}, {transform_indices = @transform_3, window_bounds = array<i64: 256, 128>}, {transform_indices = @transform_4, window_bounds = array<i64: 256, 128>}, {transform_indices = @transform_5, window_bounds = array<i64: 256, 128>}]} {
    %c0 = arith.constant 0 : index
    %c0_0 = arith.constant 0 : index
    %0 = vector.load %arg1[%c0, %c0_0] : memref<256x128xf32, #tpu.memory_space<vmem>>, vector<256x128xf32>
    %c0_1 = arith.constant 0 : index
    %c0_2 = arith.constant 0 : index
    %1 = vector.load %arg2[%c0_1, %c0_2] : memref<128x128xf32, #tpu.memory_space<vmem>>, vector<128x128xf32>
    %cst = arith.constant dense<0.000000e+00> : vector<256x128xf32>
    %2 = tpu.matmul %0, %1, %cst {dimension_numbers = #tpu.dot_dimension_numbers<[1], [0], [0], [1], [0, 0, 1, 1], [], []>} : vector<256x128xf32>, vector<128x128xf32>, vector<256x128xf32> -> vector<256x128xf32>
    %c0_3 = arith.constant 0 : index
    %c0_4 = arith.constant 0 : index
    %3 = vector.load %arg3[%c0_3, %c0_4] : memref<1x128xf32, #tpu.memory_space<vmem>>, vector<1x128xf32>
    %4 = vector.broadcast %3 : vector<1x128xf32> to vector<256x128xf32>
    %5 = arith.addf %2, %4 : vector<256x128xf32>
    %c0_5 = arith.constant 0 : index
    %c0_6 = arith.constant 0 : index
    %6 = vector.load %arg4[%c0_5, %c0_6] : memref<256x128xf32, #tpu.memory_space<vmem>>, vector<256x128xf32>
    tpu.vector_store %arg4[%c0_5, %c0_6], %5 {strides = array<i32>} : memref<256x128xf32, #tpu.memory_space<vmem>>, vector<256x128xf32>,
    %7 = arith.truncf %5 : vector<256x128xf32> to vector<256x128xbf16>
    %c0_7 = arith.constant 0 : index
    %c0_8 = arith.constant 0 : index
    %8 = vector.load %arg5[%c0_7, %c0_8] : memref<256x128xbf16, #tpu.memory_space<vmem>>, vector<256x128xbf16>
    tpu.vector_store %arg5[%c0_7, %c0_8], %7 {strides = array<i32>} : memref<256x128xbf16, #tpu.memory_space<vmem>>, vector<256x128xbf16>,
    %9 = arith.extf %7 : vector<256x128xbf16> to vector<256x128xf32>
    %10 = arith.subf %5, %9 : vector<256x128xf32>
    %11 = arith.truncf %10 : vector<256x128xf32> to vector<256x128xbf16>
    %c0_9 = arith.constant 0 : index
    %c0_10 = arith.constant 0 : index
    %12 = vector.load %arg6[%c0_9, %c0_10] : memref<256x128xbf16, #tpu.memory_space<vmem>>, vector<256x128xbf16>
    tpu.vector_store %arg6[%c0_9, %c0_10], %11 {strides = array<i32>} : memref<256x128xbf16, #tpu.memory_space<vmem>>, vector<256x128xbf16>,
    return
  }
  func.func @transform_0(%arg0: i32) -> (i32, i32) {
    %c0_i32 = arith.constant 0 : i32
    %c0_i32_0 = arith.constant 0 : i32
    return %arg0, %c0_i32 : i32, i32
  }
  func.func @transform_1(%arg0: i32) -> (i32, i32) {
    %c0_i32 = arith.constant 0 : i32
    %c0_i32_0 = arith.constant 0 : i32
    %c0_i32_1 = arith.constant 0 : i32
    return %c0_i32, %c0_i32_0 : i32, i32
  }
  func.func @transform_2(%arg0: i32) -> (i32, i32) {
    %c0_i32 = arith.constant 0 : i32
    %c0_i32_0 = arith.constant 0 : i32
    %c0_i32_1 = arith.constant 0 : i32
    return %c0_i32, %c0_i32_0 : i32, i32
  }
  func.func @transform_3(%arg0: i32) -> (i32, i32) {
    %c0_i32 = arith.constant 0 : i32
    %c0_i32_0 = arith.constant 0 : i32
    return %arg0, %c0_i32 : i32, i32
  }
  func.func @transform_4(%arg0: i32) -> (i32, i32) {
    %c0_i32 = arith.constant 0 : i32
    %c0_i32_0 = arith.constant 0 : i32
    return %arg0, %c0_i32 : i32, i32
  }
  func.func @transform_5(%arg0: i32) -> (i32, i32) {
    %c0_i32 = arith.constant 0 : i32
    %c0_i32_0 = arith.constant 0 : i32
    return %arg0, %c0_i32 : i32, i32
  }
}

</mosaic_0001>

<llo_original>
// kernel: tpu_custom_call.1
$region0: #{tpu_custom_call.1}
  #allocation0 [shape = 'u32[]', space=smem, size = 0x4, offset = 0x4, fixed_abs, tag = 'smem constant byte address 0x4 - core index']
  #allocation1 [shape = 'u32[144,128]{1,0:T(1,128)}', space=vmem, size = 0x12000, scoped, tag = 'internal scratch']
  %s0 = inlined_call_operand.hbm [shape: f32[256,128], index: 0, kind: input, shape index: {}]
  %s1 = inlined_call_operand.hbm [shape: f32[128,128], index: 1, kind: input, shape index: {}]
  %s2 = inlined_call_operand.vmem [shape: f32[1,128], index: 2, kind: input, shape index: {}]
  %s3 = inlined_call_operand.hbm [shape: f32[256,128], index: 3, kind: output, shape index: {0}]
  %s4 = inlined_call_operand.hbm [shape: bf16[256,128], index: 4, kind: output, shape index: {1}]
  %s5 = inlined_call_operand.hbm [shape: bf16[256,128], index: 5, kind: output, shape index: {2}]
  %6 = xla_tuple %s3, %s4, %s5
  %s7 = sld [smem:[#allocation0]]
  $region46: #{tpu_custom_call.1} parent=0
    _
  %s9 = ssub.s32 1, %s7
  %s10 = scalar_select 0, %s9, %s7
  $region1: #{tpu_custom_call.1} parent=0
    #allocation2 [shape = 'u8[131072]{0}', space=vmem, size = 0x20000, scoped, tag = 'input window, operand 0, single buffered']
    #allocation3 [shape = 's32[1]{0}', space=sflag, size = 0x4, scoped, tag = 'scoped memory for tpu_custom_call.1']
    #allocation4 [shape = 's32[1]{0}', space=sflag, size = 0x4, scoped, tag = 'scoped memory for tpu_custom_call.1']
    #allocation5 [shape = 'u8[65536]{0}', space=vmem, size = 0x10000, scoped, tag = 'input window, operand 1, single buffered']
    #allocation6 [shape = 's32[1]{0}', space=sflag, size = 0x4, scoped, tag = 'scoped memory for tpu_custom_call.1']
    #allocation7 [shape = 'u8[131072]{0}', space=vmem, size = 0x20000, scoped, tag = 'output window, operand 0, single buffered']
    #allocation8 [shape = 'u8[65536]{0}', space=vmem, size = 0x10000, scoped, tag = 'output window, operand 1, single buffered']
    #allocation9 [shape = 's32[1]{0}', space=sflag, size = 0x4, scoped, tag = 'scoped memory for tpu_custom_call.1']
    #allocation10 [shape = 'u8[65536]{0}', space=vmem, size = 0x10000, scoped, tag = 'output window, operand 2, single buffered']
    %11 = vsyncpa [#allocation3], 0
    %12 = vsyncpa [#allocation6], 0
    %13 = vsyncpa [#allocation4], 0
    %14 = vsyncpa [#allocation9], 0
    // Predicated region
    $region2: #{tpu_custom_call.1} parent=1 // pred_check
      _
    $region3: #{tpu_custom_call.1} parent=1 // pred_check_branch
      %16 = sbr.rel (0) target = $region5
    $region4: #{tpu_custom_call.1} parent=1 // pred_region
      %s18 = ssub.s32 4096, 4096
      %19 = vsyncadd [#allocation3], %s18
      %s20 = sshll.u32 [#allocation2], 4
      %s21 = int_to_ptr.vmem [resolvable:$true] %s20
      %26 = dma.hbm_to_vmem [thread:$0]  %s0, 4096, %s21, [#allocation3], 128, 128, 8
    $region5: #{tpu_custom_call.1} parent=1 // pred_fallthru
      _
    // Predicated region
    $region6: #{tpu_custom_call.1} parent=1 // pred_check
      _
    $region7: #{tpu_custom_call.1} parent=1 // pred_check_branch
      %28 = sbr.rel (0) target = $region9
    $region8: #{tpu_custom_call.1} parent=1 // pred_region
      %s30 = ssub.s32 2048, 2048
      %31 = vsyncadd [#allocation6], %s30
      %s32 = sshll.u32 [#allocation5], 4
      %s33 = int_to_ptr.vmem [resolvable:$true] %s32
      %38 = dma.hbm_to_vmem [thread:$0]  %s1, 2048, %s33, [#allocation6], 128, 128, 8
    $region9: #{tpu_custom_call.1} parent=1 // pred_fallthru
      _
    // Predicated region
    $region10: #{tpu_custom_call.1} parent=1 // pred_check
      _
    $region11: #{tpu_custom_call.1} parent=1 // pred_check_branch
      %40 = sbr.rel (0) target = $region13
    $region12: #{tpu_custom_call.1} parent=1 // pred_region
      _
    $region13: #{tpu_custom_call.1} parent=1 // pred_fallthru
      _
    // Predicated region
    $region14: #{tpu_custom_call.1} parent=1 // pred_check
      _
    $region15: #{tpu_custom_call.1} parent=1 // pred_check_branch
      %42 = sbr.rel (0) target = $region17
    $region16: #{tpu_custom_call.1} parent=1 // pred_region
      %43 = dma.done [#allocation3], 4096
    $region17: #{tpu_custom_call.1} parent=1 // pred_fallthru
      _
    // Predicated region
    $region18: #{tpu_custom_call.1} parent=1 // pred_check
      _
    $region19: #{tpu_custom_call.1} parent=1 // pred_check_branch
      %45 = sbr.rel (0) target = $region21
    $region20: #{tpu_custom_call.1} parent=1 // pred_region
      %46 = dma.done [#allocation6], 2048
    $region21: #{tpu_custom_call.1} parent=1 // pred_fallthru
      _
    %v47 = vld [vmem:[#allocation2] sm:$0xff]
    %v48 = vld [vmem:[#allocation2 + $0x8] sm:$0xff]
    %v49 = vld [vmem:[#allocation2 + $0x10] sm:$0xff]
    %v50 = vld [vmem:[#allocation2 + $0x18] sm:$0xff]
    %v51 = vld [vmem:[#allocation2 + $0x20] sm:$0xff]
    %v52 = vld [vmem:[#allocation2 + $0x28] sm:$0xff]
    %v53 = vld [vmem:[#allocation2 + $0x30] sm:$0xff]
    %v54 = vld [vmem:[#allocation2 + $0x38] sm:$0xff]
    %v55 = vld [vmem:[#allocation2 + $0x40] sm:$0xff]
    %v56 = vld [vmem:[#allocation2 + $0x48] sm:$0xff]
    %v57 = vld [vmem:[#allocation2 + $0x50] sm:$0xff]
    %v58 = vld [vmem:[#allocation2 + $0x58] sm:$0xff]
    %v59 = vld [vmem:[#allocation2 + $0x60] sm:$0xff]
    %v60 = vld [vmem:[#allocation2 + $0x68] sm:$0xff]
    %v61 = vld [vmem:[#allocation2 + $0x70] sm:$0xff]
    %v62 = vld [vmem:[#allocation2 + $0x78] sm:$0xff]
    %v63 = vld [vmem:[#allocation2 + $0x80] sm:$0xff]
    %v64 = vld [vmem:[#allocation2 + $0x88] sm:$0xff]
    %v65 = vld [vmem:[#allocation2 + $0x90] sm:$0xff]
    %v66 = vld [vmem:[#allocation2 + $0x98] sm:$0xff]
    %v67 = vld [vmem:[#allocation2 + $0xa0] sm:$0xff]
    %v68 = vld [vmem:[#allocation2 + $0xa8] sm:$0xff]
    %v69 = vld [vmem:[#allocation2 + $0xb0] sm:$0xff]
    %v70 = vld [vmem:[#allocation2 + $0xb8] sm:$0xff]
    %v71 = vld [vmem:[#allocation2 + $0xc0] sm:$0xff]
    %v72 = vld [vmem:[#allocation2 + $0xc8] sm:$0xff]
    %v73 = vld [vmem:[#allocation2 + $0xd0] sm:$0xff]
    %v74 = vld [vmem:[#allocation2 + $0xd8] sm:$0xff]
    %v75 = vld [vmem:[#allocation2 + $0xe0] sm:$0xff]
    %v76 = vld [vmem:[#allocation2 + $0xe8] sm:$0xff]
    %v77 = vld [vmem:[#allocation2 + $0xf0] sm:$0xff]
    %v78 = vld [vmem:[#allocation2 + $0xf8] sm:$0xff]
    %v79 = vld [vmem:[#allocation5] sm:$0xff]
    %v80 = vld [vmem:[#allocation5 + $0x8] sm:$0xff]
    %v81 = vld [vmem:[#allocation5 + $0x10] sm:$0xff]
    %v82 = vld [vmem:[#allocation5 + $0x18] sm:$0xff]
    %v83 = vld [vmem:[#allocation5 + $0x20] sm:$0xff]
    %v84 = vld [vmem:[#allocation5 + $0x28] sm:$0xff]
    %v85 = vld [vmem:[#allocation5 + $0x30] sm:$0xff]
    %v86 = vld [vmem:[#allocation5 + $0x38] sm:$0xff]
    %v87 = vld [vmem:[#allocation5 + $0x40] sm:$0xff]
    %v88 = vld [vmem:[#allocation5 + $0x48] sm:$0xff]
    %v89 = vld [vmem:[#allocation5 + $0x50] sm:$0xff]
    %v90 = vld [vmem:[#allocation5 + $0x58] sm:$0xff]
    %v91 = vld [vmem:[#allocation5 + $0x60] sm:$0xff]
    %v92 = vld [vmem:[#allocation5 + $0x68] sm:$0xff]
    %v93 = vld [vmem:[#allocation5 + $0x70] sm:$0xff]
    %v94 = vld [vmem:[#allocation5 + $0x78] sm:$0xff]
    %v95 = vld [vmem:[%s2] sm:$0x1]
    %v97 = vlaneseq
    %v98 = vshrl.u32 %v97, 7
    %v99 = vsub.s32 0, %v98
    %v100 = vrot.slane %v95, %v99
    %102 = vmatprep.subr.mxu0 0.0
    %103 = vmatpush1.msra.mxu0 %v79
    %104 = vmatprep.subr.mxu0 0.0
    %105 = vmatpush1.msra.mxu0 %v80
    %106 = vmatprep.subr.mxu0 0.0
    %107 = vmatpush1.msra.mxu0 %v81
    %108 = vmatprep.subr.mxu0 0.0
    %109 = vmatpush1.msra.mxu0 %v82
    %110 = vmatprep.subr.mxu0 0.0
    %111 = vmatpush1.msra.mxu0 %v83
    %112 = vmatprep.subr.mxu0 0.0
    %113 = vmatpush1.msra.mxu0 %v84
    %114 = vmatprep.subr.mxu0 0.0
    %115 = vmatpush1.msra.mxu0 %v85
    %116 = vmatprep.subr.mxu0 0.0
    %117 = vmatpush1.msra.mxu0 %v86
    %118 = vmatprep.subr.mxu0 0.0
    %119 = vmatpush1.msra.mxu0 %v87
    %120 = vmatprep.subr.mxu0 0.0
    %121 = vmatpush1.msra.mxu0 %v88
    %122 = vmatprep.subr.mxu0 0.0
    %123 = vmatpush1.msra.mxu0 %v89
    %124 = vmatprep.subr.mxu0 0.0
    %125 = vmatpush1.msra.mxu0 %v90
    %126 = vmatprep.subr.mxu0 0.0
    %127 = vmatpush1.msra.mxu0 %v91
    %128 = vmatprep.subr.mxu0 0.0
    %129 = vmatpush1.msra.mxu0 %v92
    %130 = vmatprep.subr.mxu0 0.0
    %131 = vmatpush1.msra.mxu0 %v93
    %132 = vmatprep.subr.mxu0 0.0
    %133 = vmatpush1.msra.mxu0 %v94
    %134 = vmatprep.subr.mxu0 0.0
    %135 = vmatpush1.msra.mxu0 0.0
    %136 = vmatprep.subr.mxu0 0.0
    %137 = vmatpush1.msra.mxu0 0.0
    %138 = vmatprep.subr.mxu0 0.0
    %139 = vmatpush1.msra.mxu0 0.0
    %140 = vmatprep.subr.mxu0 0.0
    %141 = vmatpush1.msra.mxu0 0.0
    %142 = vmatprep.subr.mxu0 0.0
    %143 = vmatpush1.msra.mxu0 0.0
    %144 = vmatprep.subr.mxu0 0.0
    %145 = vmatpush1.msra.mxu0 0.0
    %146 = vmatprep.subr.mxu0 0.0
    %147 = vmatpush1.msra.mxu0 0.0
    %148 = vmatprep.subr.mxu0 0.0
    %149 = vmatpush1.msra.mxu0 0.0
    %150 = vmatprep.subr.mxu0 0.0
    %151 = vmatpush1.msra.mxu0 0.0
    %152 = vmatprep.subr.mxu0 0.0
    %153 = vmatpush1.msra.mxu0 0.0
    %154 = vmatprep.subr.mxu0 0.0
    %155 = vmatpush1.msra.mxu0 0.0
    %156 = vmatprep.subr.mxu0 0.0
    %157 = vmatpush1.msra.mxu0 0.0
    %158 = vmatprep.subr.mxu0 0.0
    %159 = vmatpush1.msra.mxu0 0.0
    %160 = vmatprep.subr.mxu0 0.0
    %161 = vmatpush1.msra.mxu0 0.0
    %162 = vmatprep.subr.mxu0 0.0
    %163 = vmatpush1.msra.mxu0 0.0
    %164 = vmatprep.subr.mxu0 0.0
    %165 = vmatpush1.msra.mxu0 0.0
    %166 = vmatprep.mubr.f32.mxu0 0.0
    %167 = vmatmul.mubr.f32.gmra.mrb[0].mxu0 %v47
    %v168 = vpop.f32.mrb[0].mxu0
    %v169 = vadd.f32 %v100, %v168
    %v170 = vpop.f32.mrb[0].mxu0
    %171 = vmatprep.mubr.f32.mxu0 0.0
    %172 = vmatmul.mubr.f32.gmra.mrb[0].mxu0 %v48
    %v173 = vpop.f32.mrb[0].mxu0
    %v174 = vadd.f32 %v100, %v173
    %v175 = vpop.f32.mrb[0].mxu0
    %176 = vmatprep.mubr.f32.mxu0 0.0
    %177 = vmatmul.mubr.f32.gmra.mrb[0].mxu0 %v49
    %v178 = vpop.f32.mrb[0].mxu0
    %v179 = vadd.f32 %v100, %v178
    %v180 = vpop.f32.mrb[0].mxu0
    %181 = vmatprep.mubr.f32.mxu0 0.0
    %182 = vmatmul.mubr.f32.gmra.mrb[0].mxu0 %v50
    %v183 = vpop.f32.mrb[0].mxu0
    %v184 = vadd.f32 %v100, %v183
    %v185 = vpop.f32.mrb[0].mxu0
    %186 = vmatprep.mubr.f32.mxu0 0.0
    %187 = vmatmul.mubr.f32.gmra.mrb[0].mxu0 %v51
    %v188 = vpop.f32.mrb[0].mxu0
    %v189 = vadd.f32 %v100, %v188
    %v190 = vpop.f32.mrb[0].mxu0
    %191 = vmatprep.mubr.f32.mxu0 0.0
    %192 = vmatmul.mubr.f32.gmra.mrb[0].mxu0 %v52
    %v193 = vpop.f32.mrb[0].mxu0
    %v194 = vadd.f32 %v100, %v193
    %v195 = vpop.f32.mrb[0].mxu0
    %196 = vmatprep.mubr.f32.mxu0 0.0
    %197 = vmatmul.mubr.f32.gmra.mrb[0].mxu0 %v53
    %v198 = vpop.f32.mrb[0].mxu0
    %v199 = vadd.f32 %v100, %v198
    %v200 = vpop.f32.mrb[0].mxu0
    %201 = vmatprep.mubr.f32.mxu0 0.0
    %202 = vmatmul.mubr.f32.gmra.mrb[0].mxu0 %v54
    %v203 = vpop.f32.mrb[0].mxu0
    %v204 = vadd.f32 %v100, %v203
    %v205 = vpop.f32.mrb[0].mxu0
    %206 = vmatprep.mubr.f32.mxu0 0.0
    %207 = vmatmul.mubr.f32.gmra.mrb[0].mxu0 %v55
    %v208 = vpop.f32.mrb[0].mxu0
    %v209 = vadd.f32 %v100, %v208
    %v210 = vpop.f32.mrb[0].mxu0
    %211 = vmatprep.mubr.f32.mxu0 0.0
    %212 = vmatmul.mubr.f32.gmra.mrb[0].mxu0 %v56
    %v213 = vpop.f32.mrb[0].mxu0
    %v214 = vadd.f32 %v100, %v213
    %v215 = vpop.f32.mrb[0].mxu0
    %216 = vmatprep.mubr.f32.mxu0 0.0
    %217 = vmatmul.mubr.f32.gmra.mrb[0].mxu0 %v57
    %v218 = vpop.f32.mrb[0].mxu0
    %v219 = vadd.f32 %v100, %v218
    %v220 = vpop.f32.mrb[0].mxu0
    %221 = vmatprep.mubr.f32.mxu0 0.0
    %222 = vmatmul.mubr.f32.gmra.mrb[0].mxu0 %v58
    %v223 = vpop.f32.mrb[0].mxu0
    %v224 = vadd.f32 %v100, %v223
    %v225 = vpop.f32.mrb[0].mxu0
    %226 = vmatprep.mubr.f32.mxu0 0.0
    %227 = vmatmul.mubr.f32.gmra.mrb[0].mxu0 %v59
    %v228 = vpop.f32.mrb[0].mxu0
    %v229 = vadd.f32 %v100, %v228
    %v230 = vpop.f32.mrb[0].mxu0
    %231 = vmatprep.mubr.f32.mxu0 0.0
    %232 = vmatmul.mubr.f32.gmra.mrb[0].mxu0 %v60
    %v233 = vpop.f32.mrb[0].mxu0
    %v234 = vadd.f32 %v100, %v233
    %v235 = vpop.f32.mrb[0].mxu0
    %236 = vmatprep.mubr.f32.mxu0 0.0
    %237 = vmatmul.mubr.f32.gmra.mrb[0].mxu0 %v61
    %v238 = vpop.f32.mrb[0].mxu0
    %v239 = vadd.f32 %v100, %v238
    %v240 = vpop.f32.mrb[0].mxu0
    %241 = vmatprep.mubr.f32.mxu0 0.0
    %242 = vmatmul.mubr.f32.gmra.mrb[0].mxu0 %v62
    %v243 = vpop.f32.mrb[0].mxu0
    %v244 = vadd.f32 %v100, %v243
    %v245 = vpop.f32.mrb[0].mxu0
    %246 = vmatprep.mubr.f32.mxu0 0.0
    %247 = vmatmul.mubr.f32.gmra.mrb[0].mxu0 %v63
    %v248 = vpop.f32.mrb[0].mxu0
    %v249 = vadd.f32 %v100, %v248
    %v250 = vpop.f32.mrb[0].mxu0
    %251 = vmatprep.mubr.f32.mxu0 0.0
    %252 = vmatmul.mubr.f32.gmra.mrb[0].mxu0 %v64
    %v253 = vpop.f32.mrb[0].mxu0
    %v254 = vadd.f32 %v100, %v253
    %v255 = vpop.f32.mrb[0].mxu0
    %256 = vmatprep.mubr.f32.mxu0 0.0
    %257 = vmatmul.mubr.f32.gmra.mrb[0].mxu0 %v65
    %v258 = vpop.f32.mrb[0].mxu0
    %v259 = vadd.f32 %v100, %v258
    %v260 = vpop.f32.mrb[0].mxu0
    %261 = vmatprep.mubr.f32.mxu0 0.0
    %262 = vmatmul.mubr.f32.gmra.mrb[0].mxu0 %v66
    %v263 = vpop.f32.mrb[0].mxu0
    %v264 = vadd.f32 %v100, %v263
    %v265 = vpop.f32.mrb[0].mxu0
    %266 = vmatprep.mubr.f32.mxu0 0.0
    %267 = vmatmul.mubr.f32.gmra.mrb[0].mxu0 %v67
    %v268 = vpop.f32.mrb[0].mxu0
    %v269 = vadd.f32 %v100, %v268
    %v270 = vpop.f32.mrb[0].mxu0
    %271 = vmatprep.mubr.f32.mxu0 0.0
    %272 = vmatmul.mubr.f32.gmra.mrb[0].mxu0 %v68
    %v273 = vpop.f32.mrb[0].mxu0
    %v274 = vadd.f32 %v100, %v273
    %v275 = vpop.f32.mrb[0].mxu0
    %276 = vmatprep.mubr.f32.mxu0 0.0
    %277 = vmatmul.mubr.f32.gmra.mrb[0].mxu0 %v69
    %v278 = vpop.f32.mrb[0].mxu0
    %v279 = vadd.f32 %v100, %v278
    %v280 = vpop.f32.mrb[0].mxu0
    %281 = vmatprep.mubr.f32.mxu0 0.0
    %282 = vmatmul.mubr.f32.gmra.mrb[0].mxu0 %v70
    %v283 = vpop.f32.mrb[0].mxu0
    %v284 = vadd.f32 %v100, %v283
    %v285 = vpop.f32.mrb[0].mxu0
    %286 = vmatprep.mubr.f32.mxu0 0.0
    %287 = vmatmul.mubr.f32.gmra.mrb[0].mxu0 %v71
    %v288 = vpop.f32.mrb[0].mxu0
    %v289 = vadd.f32 %v100, %v288
    %v290 = vpop.f32.mrb[0].mxu0
    %291 = vmatprep.mubr.f32.mxu0 0.0
    %292 = vmatmul.mubr.f32.gmra.mrb[0].mxu0 %v72
    %v293 = vpop.f32.mrb[0].mxu0
    %v294 = vadd.f32 %v100, %v293
    %v295 = vpop.f32.mrb[0].mxu0
    %296 = vmatprep.mubr.f32.mxu0 0.0
    %297 = vmatmul.mubr.f32.gmra.mrb[0].mxu0 %v73
    %v298 = vpop.f32.mrb[0].mxu0
    %v299 = vadd.f32 %v100, %v298
    %v300 = vpop.f32.mrb[0].mxu0
    %301 = vmatprep.mubr.f32.mxu0 0.0
    %302 = vmatmul.mubr.f32.gmra.mrb[0].mxu0 %v74
    %v303 = vpop.f32.mrb[0].mxu0
    %v304 = vadd.f32 %v100, %v303
    %v305 = vpop.f32.mrb[0].mxu0
    %306 = vmatprep.mubr.f32.mxu0 0.0
    %307 = vmatmul.mubr.f32.gmra.mrb[0].mxu0 %v75
    %v308 = vpop.f32.mrb[0].mxu0
    %v309 = vadd.f32 %v100, %v308
    %v310 = vpop.f32.mrb[0].mxu0
    %311 = vmatprep.mubr.f32.mxu0 0.0
    %312 = vmatmul.mubr.f32.gmra.mrb[0].mxu0 %v76
    %v313 = vpop.f32.mrb[0].mxu0
    %v314 = vadd.f32 %v100, %v313
    %v315 = vpop.f32.mrb[0].mxu0
    %316 = vmatprep.mubr.f32.mxu0 0.0
    %317 = vmatmul.mubr.f32.gmra.mrb[0].mxu0 %v77
    %v318 = vpop.f32.mrb[0].mxu0
    %v319 = vadd.f32 %v100, %v318
    %v320 = vpop.f32.mrb[0].mxu0
    %321 = vmatprep.mubr.f32.mxu0 0.0
    %322 = vmatmul.mubr.f32.gmra.mrb[0].mxu0 %v78
    %v323 = vpop.f32.mrb[0].mxu0
    %v324 = vadd.f32 %v100, %v323
    %v325 = vpop.f32.mrb[0].mxu0
    %326 = vdwg.mxu0
    %327 = vst [vmem:[#allocation7] sm:$0xff] %v169
    %328 = vst [vmem:[#allocation7 + $0x8] sm:$0xff] %v174
    %329 = vst [vmem:[#allocation7 + $0x10] sm:$0xff] %v179
    %330 = vst [vmem:[#allocation7 + $0x18] sm:$0xff] %v184
    %331 = vst [vmem:[#allocation7 + $0x20] sm:$0xff] %v189
    %332 = vst [vmem:[#allocation7 + $0x28] sm:$0xff] %v194
    %333 = vst [vmem:[#allocation7 + $0x30] sm:$0xff] %v199
    %334 = vst [vmem:[#allocation7 + $0x38] sm:$0xff] %v204
    %335 = vst [vmem:[#allocation7 + $0x40] sm:$0xff] %v209
    %336 = vst [vmem:[#allocation7 + $0x48] sm:$0xff] %v214
    %337 = vst [vmem:[#allocation7 + $0x50] sm:$0xff] %v219
    %338 = vst [vmem:[#allocation7 + $0x58] sm:$0xff] %v224
    %339 = vst [vmem:[#allocation7 + $0x60] sm:$0xff] %v229
    %340 = vst [vmem:[#allocation7 + $0x68] sm:$0xff] %v234
    %341 = vst [vmem:[#allocation7 + $0x70] sm:$0xff] %v239
    %342 = vst [vmem:[#allocation7 + $0x78] sm:$0xff] %v244
    %343 = vst [vmem:[#allocation7 + $0x80] sm:$0xff] %v249
    %344 = vst [vmem:[#allocation7 + $0x88] sm:$0xff] %v254
    %345 = vst [vmem:[#allocation7 + $0x90] sm:$0xff] %v259
    %346 = vst [vmem:[#allocation7 + $0x98] sm:$0xff] %v264
    %347 = vst [vmem:[#allocation7 + $0xa0] sm:$0xff] %v269
    %348 = vst [vmem:[#allocation7 + $0xa8] sm:$0xff] %v274
    %349 = vst [vmem:[#allocation7 + $0xb0] sm:$0xff] %v279
    %350 = vst [vmem:[#allocation7 + $0xb8] sm:$0xff] %v284
    %351 = vst [vmem:[#allocation7 + $0xc0] sm:$0xff] %v289
    %352 = vst [vmem:[#allocation7 + $0xc8] sm:$0xff] %v294
    %353 = vst [vmem:[#allocation7 + $0xd0] sm:$0xff] %v299
    %354 = vst [vmem:[#allocation7 + $0xd8] sm:$0xff] %v304
    %355 = vst [vmem:[#allocation7 + $0xe0] sm:$0xff] %v309
    %356 = vst [vmem:[#allocation7 + $0xe8] sm:$0xff] %v314
    %357 = vst [vmem:[#allocation7 + $0xf0] sm:$0xff] %v319
    %358 = vst [vmem:[#allocation7 + $0xf8] sm:$0xff] %v324
    %v359 = vpack.c.bf16 %v174, %v169
    %v360 = vpack.c.bf16 %v184, %v179
    %v361 = vpack.c.bf16 %v194, %v189
    %v362 = vpack.c.bf16 %v204, %v199
    %v363 = vpack.c.bf16 %v214, %v209
    %v364 = vpack.c.bf16 %v224, %v219
    %v365 = vpack.c.bf16 %v234, %v229
    %v366 = vpack.c.bf16 %v244, %v239
    %v367 = vpack.c.bf16 %v254, %v249
    %v368 = vpack.c.bf16 %v264, %v259
    %v369 = vpack.c.bf16 %v274, %v269
    %v370 = vpack.c.bf16 %v284, %v279
    %v371 = vpack.c.bf16 %v294, %v289
    %v372 = vpack.c.bf16 %v304, %v299
    %v373 = vpack.c.bf16 %v314, %v309
    %v374 = vpack.c.bf16 %v324, %v319
    %v391 = vunpack.c.l.b16 %v359
    %v392 = vunpack.c.h.b16 %v359
    %v393 = vunpack.c.l.b16 %v360
    %v394 = vunpack.c.h.b16 %v360
    %v395 = vunpack.c.l.b16 %v361
    %v396 = vunpack.c.h.b16 %v361
    %v397 = vunpack.c.l.b16 %v362
    %v398 = vunpack.c.h.b16 %v362
    %v399 = vunpack.c.l.b16 %v363
    %v400 = vunpack.c.h.b16 %v363
    %v401 = vunpack.c.l.b16 %v364
    %v402 = vunpack.c.h.b16 %v364
    %v403 = vunpack.c.l.b16 %v365
    %v404 = vunpack.c.h.b16 %v365
    %v405 = vunpack.c.l.b16 %v366
    %v406 = vunpack.c.h.b16 %v366
    %v407 = vunpack.c.l.b16 %v367
    %v408 = vunpack.c.h.b16 %v367
    %v409 = vunpack.c.l.b16 %v368
    %v410 = vunpack.c.h.b16 %v368
    %v411 = vunpack.c.l.b16 %v369
    %v412 = vunpack.c.h.b16 %v369
    %v413 = vunpack.c.l.b16 %v370
    %v414 = vunpack.c.h.b16 %v370
    %v415 = vunpack.c.l.b16 %v371
    %v416 = vunpack.c.h.b16 %v371
    %v417 = vunpack.c.l.b16 %v372
    %v418 = vunpack.c.h.b16 %v372
    %v419 = vunpack.c.l.b16 %v373
    %v420 = vunpack.c.h.b16 %v373
    %v421 = vunpack.c.l.b16 %v374
    %v422 = vunpack.c.h.b16 %v374
    %v423 = vpack.c.b16 %v391, %v391
    %v424 = vpack.c.b16 %v392, %v392
    %v425 = vpack.c.b16 %v393, %v393
    %v426 = vpack.c.b16 %v394, %v394
    %v427 = vpack.c.b16 %v395, %v395
    %v428 = vpack.c.b16 %v396, %v396
    %v429 = vpack.c.b16 %v397, %v397
    %v430 = vpack.c.b16 %v398, %v398
    %v431 = vpack.c.b16 %v399, %v399
    %v432 = vpack.c.b16 %v400, %v400
    %v433 = vpack.c.b16 %v401, %v401
    %v434 = vpack.c.b16 %v402, %v402
    %v435 = vpack.c.b16 %v403, %v403
    %v436 = vpack.c.b16 %v404, %v404
    %v437 = vpack.c.b16 %v405, %v405
    %v438 = vpack.c.b16 %v406, %v406
    %v439 = vpack.c.b16 %v407, %v407
    %v440 = vpack.c.b16 %v408, %v408
    %v441 = vpack.c.b16 %v409, %v409
    %v442 = vpack.c.b16 %v410, %v410
    %v443 = vpack.c.b16 %v411, %v411
    %v444 = vpack.c.b16 %v412, %v412
    %v445 = vpack.c.b16 %v413, %v413
    %v446 = vpack.c.b16 %v414, %v414
    %v447 = vpack.c.b16 %v415, %v415
    %v448 = vpack.c.b16 %v416, %v416
    %v449 = vpack.c.b16 %v417, %v417
    %v450 = vpack.c.b16 %v418, %v418
    %v451 = vpack.c.b16 %v419, %v419
    %v452 = vpack.c.b16 %v420, %v420
    %v453 = vpack.c.b16 %v421, %v421
    %v454 = vpack.c.b16 %v422, %v422
    %487 = vst [vmem:[#allocation8] sm:$0xf] %v423
    %488 = vst [vmem:[#allocation8 + $0x4] sm:$0xf] %v424
    %489 = vst [vmem:[#allocation8 + $0x8] sm:$0xf] %v425
    %490 = vst [vmem:[#allocation8 + $0xc] sm:$0xf] %v426
    %491 = vst [vmem:[#allocation8 + $0x10] sm:$0xf] %v427
    %492 = vst [vmem:[#allocation8 + $0x14] sm:$0xf] %v428
    %493 = vst [vmem:[#allocation8 + $0x18] sm:$0xf] %v429
    %494 = vst [vmem:[#allocation8 + $0x1c] sm:$0xf] %v430
    %495 = vst [vmem:[#allocation8 + $0x20] sm:$0xf] %v431
    %496 = vst [vmem:[#allocation8 + $0x24] sm:$0xf] %v432
    %497 = vst [vmem:[#allocation8 + $0x28] sm:$0xf] %v433
    %498 = vst [vmem:[#allocation8 + $0x2c] sm:$0xf] %v434
    %499 = vst [vmem:[#allocation8 + $0x30] sm:$0xf] %v435
    %500 = vst [vmem:[#allocation8 + $0x34] sm:$0xf] %v436
    %501 = vst [vmem:[#allocation8 + $0x38] sm:$0xf] %v437
    %502 = vst [vmem:[#allocation8 + $0x3c] sm:$0xf] %v438
    %503 = vst [vmem:[#allocation8 + $0x40] sm:$0xf] %v439
    %504 = vst [vmem:[#allocation8 + $0x44] sm:$0xf] %v440
    %505 = vst [vmem:[#allocation8 + $0x48] sm:$0xf] %v441
    %506 = vst [vmem:[#allocation8 + $0x4c] sm:$0xf] %v442
    %507 = vst [vmem:[#allocation8 + $0x50] sm:$0xf] %v443
    %508 = vst [vmem:[#allocation8 + $0x54] sm:$0xf] %v444
    %509 = vst [vmem:[#allocation8 + $0x58] sm:$0xf] %v445
    %510 = vst [vmem:[#allocation8 + $0x5c] sm:$0xf] %v446
    %511 = vst [vmem:[#allocation8 + $0x60] sm:$0xf] %v447
    %512 = vst [vmem:[#allocation8 + $0x64] sm:$0xf] %v448
    %513 = vst [vmem:[#allocation8 + $0x68] sm:$0xf] %v449
    %514 = vst [vmem:[#allocation8 + $0x6c] sm:$0xf] %v450
    %515 = vst [vmem:[#allocation8 + $0x70] sm:$0xf] %v451
    %516 = vst [vmem:[#allocation8 + $0x74] sm:$0xf] %v452
    %517 = vst [vmem:[#allocation8 + $0x78] sm:$0xf] %v453
    %518 = vst [vmem:[#allocation8 + $0x7c] sm:$0xf] %v454
    %v519 = vunpack.c.l.bf16 %v359
    %v520 = vunpack.c.h.bf16 %v359
    %v521 = vunpack.c.l.bf16 %v360
    %v522 = vunpack.c.h.bf16 %v360
    %v523 = vunpack.c.l.bf16 %v361
    %v524 = vunpack.c.h.bf16 %v361
    %v525 = vunpack.c.l.bf16 %v362
    %v526 = vunpack.c.h.bf16 %v362
    %v527 = vunpack.c.l.bf16 %v363
    %v528 = vunpack.c.h.bf16 %v363
    %v529 = vunpack.c.l.bf16 %v364
    %v530 = vunpack.c.h.bf16 %v364
    %v531 = vunpack.c.l.bf16 %v365
    %v532 = vunpack.c.h.bf16 %v365
    %v533 = vunpack.c.l.bf16 %v366
    %v534 = vunpack.c.h.bf16 %v366
    %v535 = vunpack.c.l.bf16 %v367
    %v536 = vunpack.c.h.bf16 %v367
    %v537 = vunpack.c.l.bf16 %v368
    %v538 = vunpack.c.h.bf16 %v368
    %v539 = vunpack.c.l.bf16 %v369
    %v540 = vunpack.c.h.bf16 %v369
    %v541 = vunpack.c.l.bf16 %v370
    %v542 = vunpack.c.h.bf16 %v370
    %v543 = vunpack.c.l.bf16 %v371
    %v544 = vunpack.c.h.bf16 %v371
    %v545 = vunpack.c.l.bf16 %v372
    %v546 = vunpack.c.h.bf16 %v372
    %v547 = vunpack.c.l.bf16 %v373
    %v548 = vunpack.c.h.bf16 %v373
    %v549 = vunpack.c.l.bf16 %v374
    %v550 = vunpack.c.h.bf16 %v374
    %v551 = vsub.f32 %v169, %v519
    %v552 = vsub.f32 %v174, %v520
    %v553 = vsub.f32 %v179, %v521
    %v554 = vsub.f32 %v184, %v522
    %v555 = vsub.f32 %v189, %v523
    %v556 = vsub.f32 %v194, %v524
    %v557 = vsub.f32 %v199, %v525
    %v558 = vsub.f32 %v204, %v526
    %v559 = vsub.f32 %v209, %v527
    %v560 = vsub.f32 %v214, %v528
    %v561 = vsub.f32 %v219, %v529
    %v562 = vsub.f32 %v224, %v530
    %v563 = vsub.f32 %v229, %v531
    %v564 = vsub.f32 %v234, %v532
    %v565 = vsub.f32 %v239, %v533
    %v566 = vsub.f32 %v244, %v534
    %v567 = vsub.f32 %v249, %v535
    %v568 = vsub.f32 %v254, %v536
    %v569 = vsub.f32 %v259, %v537
    %v570 = vsub.f32 %v264, %v538
    %v571 = vsub.f32 %v269, %v539
    %v572 = vsub.f32 %v274, %v540
    %v573 = vsub.f32 %v279, %v541
    %v574 = vsub.f32 %v284, %v542
    %v575 = vsub.f32 %v289, %v543
    %v576 = vsub.f32 %v294, %v544
    %v577 = vsub.f32 %v299, %v545
    %v578 = vsub.f32 %v304, %v546
    %v579 = vsub.f32 %v309, %v547
    %v580 = vsub.f32 %v314, %v548
    %v581 = vsub.f32 %v319, %v549
    %v582 = vsub.f32 %v324, %v550
    %v583 = vpack.c.bf16 %v552, %v551
    %v584 = vpack.c.bf16 %v554, %v553
    %v585 = vpack.c.bf16 %v556, %v555
    %v586 = vpack.c.bf16 %v558, %v557
    %v587 = vpack.c.bf16 %v560, %v559
    %v588 = vpack.c.bf16 %v562, %v561
    %v589 = vpack.c.bf16 %v564, %v563
    %v590 = vpack.c.bf16 %v566, %v565
    %v591 = vpack.c.bf16 %v568, %v567
    %v592 = vpack.c.bf16 %v570, %v569
    %v593 = vpack.c.bf16 %v572, %v571
    %v594 = vpack.c.bf16 %v574, %v573
    %v595 = vpack.c.bf16 %v576, %v575
    %v596 = vpack.c.bf16 %v578, %v577
    %v597 = vpack.c.bf16 %v580, %v579
    %v598 = vpack.c.bf16 %v582, %v581
    %v615 = vunpack.c.l.b16 %v583
    %v616 = vunpack.c.h.b16 %v583
    %v617 = vunpack.c.l.b16 %v584
    %v618 = vunpack.c.h.b16 %v584
    %v619 = vunpack.c.l.b16 %v585
    %v620 = vunpack.c.h.b16 %v585
    %v621 = vunpack.c.l.b16 %v586
    %v622 = vunpack.c.h.b16 %v586
    %v623 = vunpack.c.l.b16 %v587
    %v624 = vunpack.c.h.b16 %v587
    %v625 = vunpack.c.l.b16 %v588
    %v626 = vunpack.c.h.b16 %v588
    %v627 = vunpack.c.l.b16 %v589
    %v628 = vunpack.c.h.b16 %v589
    %v629 = vunpack.c.l.b16 %v590
    %v630 = vunpack.c.h.b16 %v590
    %v631 = vunpack.c.l.b16 %v591
    %v632 = vunpack.c.h.b16 %v591
    %v633 = vunpack.c.l.b16 %v592
    %v634 = vunpack.c.h.b16 %v592
    %v635 = vunpack.c.l.b16 %v593
    %v636 = vunpack.c.h.b16 %v593
    %v637 = vunpack.c.l.b16 %v594
    %v638 = vunpack.c.h.b16 %v594
    %v639 = vunpack.c.l.b16 %v595
    %v640 = vunpack.c.h.b16 %v595
    %v641 = vunpack.c.l.b16 %v596
    %v642 = vunpack.c.h.b16 %v596
    %v643 = vunpack.c.l.b16 %v597
    %v644 = vunpack.c.h.b16 %v597
    %v645 = vunpack.c.l.b16 %v598
    %v646 = vunpack.c.h.b16 %v598
    %v647 = vpack.c.b16 %v615, %v615
    %v648 = vpack.c.b16 %v616, %v616
    %v649 = vpack.c.b16 %v617, %v617
    %v650 = vpack.c.b16 %v618, %v618
    %v651 = vpack.c.b16 %v619, %v619
    %v652 = vpack.c.b16 %v620, %v620
    %v653 = vpack.c.b16 %v621, %v621
    %v654 = vpack.c.b16 %v622, %v622
    %v655 = vpack.c.b16 %v623, %v623
    %v656 = vpack.c.b16 %v624, %v624
    %v657 = vpack.c.b16 %v625, %v625
    %v658 = vpack.c.b16 %v626, %v626
    %v659 = vpack.c.b16 %v627, %v627
    %v660 = vpack.c.b16 %v628, %v628
    %v661 = vpack.c.b16 %v629, %v629
    %v662 = vpack.c.b16 %v630, %v630
    %v663 = vpack.c.b16 %v631, %v631
    %v664 = vpack.c.b16 %v632, %v632
    %v665 = vpack.c.b16 %v633, %v633
    %v666 = vpack.c.b16 %v634, %v634
    %v667 = vpack.c.b16 %v635, %v635
    %v668 = vpack.c.b16 %v636, %v636
    %v669 = vpack.c.b16 %v637, %v637
    %v670 = vpack.c.b16 %v638, %v638
    %v671 = vpack.c.b16 %v639, %v639
    %v672 = vpack.c.b16 %v640, %v640
    %v673 = vpack.c.b16 %v641, %v641
    %v674 = vpack.c.b16 %v642, %v642
    %v675 = vpack.c.b16 %v643, %v643
    %v676 = vpack.c.b16 %v644, %v644
    %v677 = vpack.c.b16 %v645, %v645
    %v678 = vpack.c.b16 %v646, %v646
    %711 = vst [vmem:[#allocation10] sm:$0xf] %v647
    %712 = vst [vmem:[#allocation10 + $0x4] sm:$0xf] %v648
    %713 = vst [vmem:[#allocation10 + $0x8] sm:$0xf] %v649
    %714 = vst [vmem:[#allocation10 + $0xc] sm:$0xf] %v650
    %715 = vst [vmem:[#allocation10 + $0x10] sm:$0xf] %v651
    %716 = vst [vmem:[#allocation10 + $0x14] sm:$0xf] %v652
    %717 = vst [vmem:[#allocation10 + $0x18] sm:$0xf] %v653
    %718 = vst [vmem:[#allocation10 + $0x1c] sm:$0xf] %v654
    %719 = vst [vmem:[#allocation10 + $0x20] sm:$0xf] %v655
    %720 = vst [vmem:[#allocation10 + $0x24] sm:$0xf] %v656
    %721 = vst [vmem:[#allocation10 + $0x28] sm:$0xf] %v657
    %722 = vst [vmem:[#allocation10 + $0x2c] sm:$0xf] %v658
    %723 = vst [vmem:[#allocation10 + $0x30] sm:$0xf] %v659
    %724 = vst [vmem:[#allocation10 + $0x34] sm:$0xf] %v660
    %725 = vst [vmem:[#allocation10 + $0x38] sm:$0xf] %v661
    %726 = vst [vmem:[#allocation10 + $0x3c] sm:$0xf] %v662
    %727 = vst [vmem:[#allocation10 + $0x40] sm:$0xf] %v663
    %728 = vst [vmem:[#allocation10 + $0x44] sm:$0xf] %v664
    %729 = vst [vmem:[#allocation10 + $0x48] sm:$0xf] %v665
    %730 = vst [vmem:[#allocation10 + $0x4c] sm:$0xf] %v666
    %731 = vst [vmem:[#allocation10 + $0x50] sm:$0xf] %v667
    %732 = vst [vmem:[#allocation10 + $0x54] sm:$0xf] %v668
    %733 = vst [vmem:[#allocation10 + $0x58] sm:$0xf] %v669
    %734 = vst [vmem:[#allocation10 + $0x5c] sm:$0xf] %v670
    %735 = vst [vmem:[#allocation10 + $0x60] sm:$0xf] %v671
    %736 = vst [vmem:[#allocation10 + $0x64] sm:$0xf] %v672
    %737 = vst [vmem:[#allocation10 + $0x68] sm:$0xf] %v673
    %738 = vst [vmem:[#allocation10 + $0x6c] sm:$0xf] %v674
    %739 = vst [vmem:[#allocation10 + $0x70] sm:$0xf] %v675
    %740 = vst [vmem:[#allocation10 + $0x74] sm:$0xf] %v676
    %741 = vst [vmem:[#allocation10 + $0x78] sm:$0xf] %v677
    %742 = vst [vmem:[#allocation10 + $0x7c] sm:$0xf] %v678
    // Predicated region
    $region22: #{tpu_custom_call.1} parent=1 // pred_check
      _
    $region23: #{tpu_custom_call.1} parent=1 // pred_check_branch
      %744 = sbr.rel (0) target = $region25
    $region24: #{tpu_custom_call.1} parent=1 // pred_region
      %s746 = ssub.s32 4096, 4096
      %747 = vsyncadd [#allocation4], %s746
      %s748 = sshll.u32 [#allocation7], 4
      %s749 = int_to_ptr.vmem [resolvable:$true] %s748
      %754 = dma.vmem_to_hbm [thread:$0]  %s749, 4096, %s3, [#allocation4], 128, 128, 8
    $region25: #{tpu_custom_call.1} parent=1 // pred_fallthru
      _
    // Predicated region
    $region26: #{tpu_custom_call.1} parent=1 // pred_check
      _
    $region27: #{tpu_custom_call.1} parent=1 // pred_check_branch
      %756 = sbr.rel (0) target = $region29
    $region28: #{tpu_custom_call.1} parent=1 // pred_region
      %s758 = ssub.s32 2048, 2048
      %759 = vsyncadd [#allocation9], %s758
      %s760 = sshll.u32 [#allocation8], 4
      %s761 = int_to_ptr.vmem [resolvable:$true] %s760
      %766 = dma.vmem_to_hbm [thread:$0]  %s761, 2048, %s4, [#allocation9], 64, 64, 4
    $region29: #{tpu_custom_call.1} parent=1 // pred_fallthru
      _
    // Predicated region
    $region30: #{tpu_custom_call.1} parent=1 // pred_check
      _
    $region31: #{tpu_custom_call.1} parent=1 // pred_check_branch
      %768 = sbr.rel (0) target = $region33
    $region32: #{tpu_custom_call.1} parent=1 // pred_region
      %s770 = ssub.s32 2048, 2048
      %771 = vsyncadd [#allocation9], %s770
      %s772 = sshll.u32 [#allocation10], 4
      %s773 = int_to_ptr.vmem [resolvable:$true] %s772
      %778 = dma.vmem_to_hbm [thread:$0]  %s773, 2048, %s5, [#allocation9], 64, 64, 4
    $region33: #{tpu_custom_call.1} parent=1 // pred_fallthru
      _
    // Predicated region
    $region34: #{tpu_custom_call.1} parent=1 // pred_check
      _
    $region35: #{tpu_custom_call.1} parent=1 // pred_check_branch
      %780 = sbr.rel (0) target = $region37
    $region36: #{tpu_custom_call.1} parent=1 // pred_region
      %781 = dma.done [#allocation4], 4096
    $region37: #{tpu_custom_call.1} parent=1 // pred_fallthru
      _
    // Predicated region
    $region38: #{tpu_custom_call.1} parent=1 // pred_check
      _
    $region39: #{tpu_custom_call.1} parent=1 // pred_check_branch
      %783 = sbr.rel (0) target = $region41
    $region40: #{tpu_custom_call.1} parent=1 // pred_region
      %784 = dma.done [#allocation9], 2048
    $region41: #{tpu_custom_call.1} parent=1 // pred_fallthru
      _
    // Predicated region
    $region42: #{tpu_custom_call.1} parent=1 // pred_check
      _
    $region43: #{tpu_custom_call.1} parent=1 // pred_check_branch
      %786 = sbr.rel (0) target = $region45
    $region44: #{tpu_custom_call.1} parent=1 // pred_region
      %787 = dma.done [#allocation9], 2048
    $region45: #{tpu_custom_call.1} parent=1 // pred_fallthru
      _
    %788 = vsyncpa [#allocation3], 1
    %789 = vsyncpa [#allocation6], 1
    %790 = vsyncpa [#allocation4], 1
    %791 = vsyncpa [#allocation9], 1

</llo_original>
